<compile_context>
chip_gen: v7x
topology: tpu7x:2x2x1
jax: 0.10.0
libtpu: 0.0.40
codegen_flags: <defaults>
</compile_context>

<pallas_src>
import functools

import jax
import jax.numpy as jnp
from jax.experimental import pallas as pl
from jax.experimental.pallas import tpu as pltpu

F_PAD = 128               # lane-dense feature slab width (all layer dims padded to this)
ONES_LANE = F_PAD - 3     # 125: lane of HF forced to 1.0 -> agg[:, 125] = softmax row-sum
ASRC_LANE = F_PAD - 2     # 126: (X W) @ att_src^T (folded into the packed weight)
ADST_LANE = F_PAD - 1     # 127: (X W) @ att_dst^T
NEG_SLOPE = 0.2           # GATConv default negative_slope


# ----------------------------- Fused Pallas kernel -------------------------- #

def mesh_encoder_kernel(x_ref, adj_ref, pool_ref, w_ref, b_ref, out_ref,
                        h_sc, hf_sc, asrc_sc, adst_sc, shift_sc, *, out_dim):
    l = pl.program_id(0)                    # layer index            (outer, "arbitrary")
    t = pl.program_id(1)                    # destination row tile   (inner, "arbitrary")
    num_layers = pl.num_programs(0)
    num_tiles = pl.num_programs(1)
    tile_n = adj_ref.shape[0]

    # ---------------- once per layer (t == 0): projection + per-layer hoists ---------- #
    @pl.when(t == 0)
    def _layer_setup():
        @pl.when(l == 0)
        def _load_x():
            h_sc[...] = x_ref[...]          # node features -> persistent VMEM h buffer

        # One bf16 MXU pass yields projected features AND both attention scores:
        #   hf[:, :fout]     = H = X @ W
        #   hf[:, ASRC_LANE] = a_src = H @ att_src^T
        #   hf[:, ADST_LANE] = a_dst = H @ att_dst^T
        hf = jnp.dot(h_sc[...].astype(jnp.bfloat16), w_ref[l],
                     preferred_element_type=jnp.float32)           # (Np, F_PAD) f32
        lane = jax.lax.broadcasted_iota(jnp.int32, hf.shape, 1)
        hf = jnp.where(lane == ONES_LANE, 1.0, hf)                 # ones lane -> MXU row-sum
        a_src = hf[:, ASRC_LANE:ASRC_LANE + 1]                     # (Np, 1)
        a_dst = hf[:, ADST_LANE:ADST_LANE + 1]                     # (Np, 1)
        asrc_sc[...] = a_src.T              # (1, Np) lane row; one XLU transpose per layer
        adst_sc[...] = a_dst
        # Scalar softmax stabilizer: M = max_j a_src_j (O(N) reduce).  leaky_relu is
        # monotone, so shift_i = leaky(a_dst_i + M) >= e_ij for every j (masked or not),
        # hence exp(e - shift) <= 1; softmax is shift-invariant so the result is unchanged.
        mx = jnp.max(a_src)
        sd = a_dst + mx
        shift_sc[...] = jnp.where(sd > 0, sd, NEG_SLOPE * sd)
        hf_sc[...] = hf.astype(jnp.bfloat16)                       # bf16 RHS for P @ HF

    # ---------------- per destination-row tile ---------------------------------------- #
    row0 = pl.multiple_of(t * tile_n, tile_n)
    a_dst = adst_sc[pl.ds(row0, tile_n), :]                        # (T, 1)  f32
    shift = shift_sc[pl.ds(row0, tile_n), :]                       # (T, 1)  f32
    z = a_dst + asrc_sc[...]                                       # (T, Np) f32
    e = jnp.where(z > 0, z, NEG_SLOPE * z)                         # LeakyReLU (VPU)
    # Masking = multiply by the int8 adjacency tile (adj in {0,1}, exp(..) <= 1 so exact).
    p = jnp.exp(e - shift) * adj_ref[...].astype(jnp.float32)      # (T, Np) f32
    agg = jnp.dot(p.astype(jnp.bfloat16), hf_sc[...],
                  preferred_element_type=jnp.float32)              # (T, F_PAD) f32
    rowsum = jnp.maximum(agg[:, ONES_LANE:ONES_LANE + 1], 1e-30)   # from the MXU ones lane
    h_new = agg * pl.reciprocal(rowsum, approx=True) + b_ref[l]    # normalize after matmul
    # ReLU between layers only (branch-free blend on a scalar flag).
    relu_flag = (l < num_layers - 1).astype(jnp.float32)
    h_new = h_new - relu_flag * jnp.minimum(h_new, 0.0)
    h_sc[pl.ds(row0, tile_n), :] = h_new                           # next layer's input rows

    # ---------------- finalize: mean-pool + L2 normalize on the last grid step -------- #
    @pl.when(jnp.logical_and(l == num_layers - 1, t == num_tiles - 1))
    def _finalize():
        pooled = jnp.dot(pool_ref[...], h_sc[...].astype(jnp.bfloat16),
                         preferred_element_type=jnp.float32)       # (G, F_PAD)
        lane = jax.lax.broadcasted_iota(jnp.int32, pooled.shape, 1)
        pooled = jnp.where(lane < out_dim, pooled, 0.0)            # drop pad / score lanes
        norm = jnp.sqrt(jnp.sum(pooled * pooled, axis=-1, keepdims=True))
        out_ref[...] = pooled / jnp.maximum(norm, 1e-12)           # exact divide, tiny (G,128)


# ------------------------------ Wrappers ------------------------------------ #

def _pack_layer_params(params):
    """Pad per-layer weights to (F_PAD, F_PAD) bf16 slabs and fold the attention
    projections (W @ att_src^T, W @ att_dst^T) into lanes ASRC_LANE / ADST_LANE so a single
    MXU pass per layer produces H, a_src and a_dst."""
    ws, bs = [], []
    for p in params:
        fin, fout = p["w"].shape
        # Lanes ONES_LANE..ADST_LANE are reserved.  fin/fout <= ONES_LANE guarantees the
        # NEXT layer's weight rows at those lanes are zero, so the row-sum / score junk
        # carried in those lanes of h can never contaminate the following projection.
        assert fin <= ONES_LANE and fout <= ONES_LANE
        w_full = jnp.zeros((F_PAD, F_PAD), jnp.float32)
        w_full = w_full.at[:fin, :fout].set(p["w"])
        w_full = w_full.at[:fin, ASRC_LANE:ASRC_LANE + 1].set(p["w"] @ p["att_src"].T)
        w_full = w_full.at[:fin, ADST_LANE:ADST_LANE + 1].set(p["w"] @ p["att_dst"].T)
        ws.append(w_full)
        bs.append(jnp.zeros((1, F_PAD), jnp.float32).at[:, :fout].set(p["bias"]))
    # Weights feed the MXU -> bf16.  Bias stays f32 (part of the f32 elementwise chain).
    return jnp.stack(ws).astype(jnp.bfloat16), jnp.stack(bs)


def mesh_encoder_forward(x, edge_index, batch, params, num_graphs, *, tile_n=256):
    """Full MeshEncoder forward pass (GAT num_layers=3, heads=1) in one fused kernel.

    tile_n: destination-node rows per grid step.  Multiple of 32 (int8 sublane packing);
    size it against the target chip's scoped VMEM (v6e: go big, >=512; v7x: ~half that)."""
    n, fin = x.shape
    num_layers = len(params)
    out_dim = params[-1]["w"].shape[1]

    assert tile_n % 32 == 0, "row tile must be a multiple of 32 (int8 sublane packing)"
    n_pad = ((n + tile_n - 1) // tile_n) * tile_n
    num_tiles = n_pad // tile_n

    # Dense int8 adjacency: A[i, j] = 1 iff edge j -> i.  Self-loops for ALL n_pad rows
    # (add_self_loops=True for real nodes; keeps padded rows' softmax finite).  Padded
    # columns stay 0, so padded nodes never feed real rows, and pool zero-weights them.
    src, dst = edge_index[0], edge_index[1]
    adj = jnp.zeros((n_pad, n_pad), jnp.int8)
    adj = adj.at[dst, src].set(1)
    idx = jnp.arange(n_pad)
    adj = adj.at[idx, idx].set(1)

    # Mean-pool matrix P[g, n] = 1/|graph g| (bf16 MXU operand); zero on padded nodes.
    one_hot = (batch[None, :] == jnp.arange(num_graphs)[:, None]).astype(jnp.float32)
    counts = jnp.maximum(jnp.sum(one_hot, axis=1, keepdims=True), 1.0)
    pool = jnp.zeros((num_graphs, n_pad), jnp.float32).at[:, :n].set(one_hot / counts)
    pool = pool.astype(jnp.bfloat16)

    # Features padded into the lane-dense slab.
    x_pad = jnp.zeros((n_pad, F_PAD), jnp.float32).at[:n, :fin].set(x)

    w_stack, b_stack = _pack_layer_params(params)

    kern = functools.partial(mesh_encoder_kernel, out_dim=out_dim)

    flops = (num_layers * (2 * n_pad * F_PAD * F_PAD + 2 * n_pad * n_pad * F_PAD)
             + 2 * num_graphs * n_pad * F_PAD)
    bytes_accessed = (x_pad.size * 4 + num_layers * adj.size + pool.size * 2
                      + w_stack.size * 2 + b_stack.size * 4 + num_graphs * F_PAD * 4)

    out_pad = pl.pallas_call(
        kern,
        out_shape=jax.ShapeDtypeStruct((num_graphs, F_PAD), jnp.float32),
        grid=(num_layers, num_tiles),
        in_specs=[
            pl.BlockSpec((n_pad, F_PAD), lambda l, t: (0, 0)),              # x      (resident)
            pl.BlockSpec((tile_n, n_pad), lambda l, t: (t, 0)),             # adj    (streamed)
            pl.BlockSpec((num_graphs, n_pad), lambda l, t: (0, 0)),         # pool   (resident)
            pl.BlockSpec((num_layers, F_PAD, F_PAD), lambda l, t: (0, 0, 0)),  # W   (resident)
            pl.BlockSpec((num_layers, 1, F_PAD), lambda l, t: (0, 0, 0)),      # b   (resident)
        ],
        out_specs=pl.BlockSpec((num_graphs, F_PAD), lambda l, t: (0, 0)),
        scratch_shapes=[
            pltpu.VMEM((n_pad, F_PAD), jnp.float32),    # h  (layer input, overwritten in place)
            pltpu.VMEM((n_pad, F_PAD), jnp.bfloat16),   # HF (+ ones / a_src / a_dst lanes)
            pltpu.VMEM((1, n_pad), jnp.float32),        # a_src as a lane row (hoisted transpose)
            pltpu.VMEM((n_pad, 1), jnp.float32),        # a_dst column
            pltpu.VMEM((n_pad, 1), jnp.float32),        # per-row softmax shift
        ],
        compiler_params=pltpu.CompilerParams(
            # Both axes are "arbitrary": layer l+1 tiles read every tile of layer l via the
            # VMEM h scratch, so the row-tile axis cannot be megacore-parallel while the
            # three layers stay fused in one call.
            dimension_semantics=("arbitrary", "arbitrary"),
            vmem_limit_bytes=48 * 1024 * 1024),
        cost_estimate=pl.CostEstimate(
            flops=flops,
            transcendentals=num_layers * n_pad * n_pad,
            bytes_accessed=bytes_accessed),
    )(x_pad, adj, pool, w_stack, b_stack)

    return out_pad[:, :out_dim]


# ------------------------------ Param init ----------------------------------- #

def init_gat_params(key, input_dim, joint_embed_dim):
    hidden = joint_embed_dim // 2
    dims = [(input_dim, hidden), (hidden, hidden), (hidden, joint_embed_dim)]
    params = []
    for fin, fout in dims:
        key, k_w, k_s, k_d = jax.random.split(key, 4)
        scale = 1.0 / jnp.sqrt(jnp.float32(fin))
        params.append({
            "w":       jax.random.normal(k_w, (fin, fout), jnp.float32) * scale,
            "att_src": jax.random.normal(k_s, (1, fout), jnp.float32) * 0.1,
            "att_dst": jax.random.normal(k_d, (1, fout), jnp.float32) * 0.1,
            "bias":    jnp.zeros((1, fout), jnp.float32),
        })
    return params


# --------------------------------- Main --------------------------------------- #

if __name__ == "__main__":
    key = jax.random.PRNGKey(0)

    input_dim = 8
    joint_embed_dim = 32
    nodes_per_graph = 24
    num_graphs = 2
    n = nodes_per_graph * num_graphs

    # Node features.
    key, k_x = jax.random.split(key)
    x = jax.random.normal(k_x, (n, input_dim), jnp.float32)

    # Bidirectional ring edges inside each graph (unique edges).
    srcs, dsts = [], []
    for g in range(num_graphs):
        off = g * nodes_per_graph
        for i in range(nodes_per_graph):
            a = off + i
            b = off + (i + 1) % nodes_per_graph
            srcs += [a, b]
            dsts += [b, a]
    edge_index = jnp.array([srcs, dsts], dtype=jnp.int32)          # (2, 96)

    batch = jnp.repeat(jnp.arange(num_graphs, dtype=jnp.int32), nodes_per_graph)

    params = init_gat_params(key, input_dim, joint_embed_dim)

    # tile_n=32 so the tiled path actually runs multiple row tiles at this toy size.
    emb = mesh_encoder_forward(x, edge_index, batch, params, num_graphs, tile_n=32)
    emb = jax.block_until_ready(emb)

    assert emb.shape == (num_graphs, joint_embed_dim)
    assert bool(jnp.all(jnp.isfinite(emb)))
    # rows should be unit-norm after F.normalize(dim=1)
    assert bool(jnp.all(jnp.abs(jnp.linalg.norm(emb, axis=1) - 1.0) < 1e-4))
    print("KERNEL_OK")
</pallas_src>

<mosaic_0001>
module attributes {stable_mosaic.version = 11 : i64} {
  func.func @mesh_encoder_kernel(%arg0: i32, %arg1: i32, %arg2: memref<64x128xf32, #tpu.memory_space<vmem>>, %arg3: memref<32x64xi8, #tpu.memory_space<vmem>>, %arg4: memref<2x64xbf16, #tpu.memory_space<vmem>>, %arg5: memref<3x128x128xbf16, #tpu.memory_space<vmem>>, %arg6: memref<3x1x128xf32, #tpu.memory_space<vmem>>, %arg7: memref<2x128xf32, #tpu.memory_space<vmem>>, %arg8: memref<64x128xf32, #tpu.memory_space<vmem>>, %arg9: memref<64x128xbf16, #tpu.memory_space<vmem>>, %arg10: memref<1x64xf32, #tpu.memory_space<vmem>>, %arg11: memref<64x1xf32, #tpu.memory_space<vmem>>, %arg12: memref<64x1xf32, #tpu.memory_space<vmem>>) attributes {dimension_semantics = [#tpu.dimension_semantics<arbitrary>, #tpu.dimension_semantics<arbitrary>], iteration_bounds = array<i64: 3, 2>, scalar_prefetch = 0 : i64, scratch_operands = 5 : i64, tpu.core_type = #tpu.core_type<tc>, window_params = [{pipeline_mode = #tpu.pipeline_mode<synchronous>, transform_indices = @transform_0, window_bounds = array<i64: 64, 128>}, {transform_indices = @transform_1, window_bounds = array<i64: 32, 64>}, {pipeline_mode = #tpu.pipeline_mode<synchronous>, transform_indices = @transform_2, window_bounds = array<i64: 2, 64>}, {pipeline_mode = #tpu.pipeline_mode<synchronous>, transform_indices = @transform_3, window_bounds = array<i64: 3, 128, 128>}, {pipeline_mode = #tpu.pipeline_mode<synchronous>, transform_indices = @transform_4, window_bounds = array<i64: 3, 1, 128>}, {pipeline_mode = #tpu.pipeline_mode<synchronous>, transform_indices = @transform_5, window_bounds = array<i64: 2, 128>}]} {
    %c0_i32 = arith.constant 0 : i32
    %0 = arith.cmpi eq, %arg1, %c0_i32 : i32
    %1 = arith.extui %0 : i1 to i32
    %c0_i32_0 = arith.constant 0 : i32
    %2 = arith.cmpi ne, %1, %c0_i32_0 : i32
    scf.if %2 {
      %c0_i32_17 = arith.constant 0 : i32
      %53 = arith.cmpi eq, %arg0, %c0_i32_17 : i32
      %54 = arith.extui %53 : i1 to i32
      %c0_i32_18 = arith.constant 0 : i32
      %55 = arith.cmpi ne, %54, %c0_i32_18 : i32
      scf.if %55 {
        %c0_36 = arith.constant 0 : index
        %c0_37 = arith.constant 0 : index
        %86 = vector.load %arg2[%c0_36, %c0_37] : memref<64x128xf32, #tpu.memory_space<vmem>>, vector<64x128xf32>
        %c0_38 = arith.constant 0 : index
        %c0_39 = arith.constant 0 : index
        %87 = vector.load %arg8[%c0_38, %c0_39] : memref<64x128xf32, #tpu.memory_space<vmem>>, vector<64x128xf32>
        tpu.vector_store %arg8[%c0_38, %c0_39], %86 {strides = array<i32>} : memref<64x128xf32, #tpu.memory_space<vmem>>, vector<64x128xf32>,
      } else {
      }
      %c0_19 = arith.constant 0 : index
      %c0_20 = arith.constant 0 : index
      %56 = vector.load %arg8[%c0_19, %c0_20] : memref<64x128xf32, #tpu.memory_space<vmem>>, vector<64x128xf32>
      %57 = arith.truncf %56 : vector<64x128xf32> to vector<64x128xbf16>
      %58 = arith.index_cast %arg0 : i32 to index
      %c0_21 = arith.constant 0 : index
      %c0_22 = arith.constant 0 : index
      %59 = vector.load %arg5[%58, %c0_21, %c0_22] : memref<3x128x128xbf16, #tpu.memory_space<vmem>>, vector<1x128x128xbf16>
      %60 = vector.shape_cast %59 : vector<1x128x128xbf16> to vector<128x128xbf16>
      %cst_23 = arith.constant dense<0.000000e+00> : vector<64x128xf32>
      %61 = tpu.matmul %57, %60, %cst_23 {dimension_numbers = #tpu.dot_dimension_numbers<[1], [0], [0], [1], [0, 0, 1, 1], [], []>} : vector<64x128xbf16>, vector<128x128xbf16>, vector<64x128xf32> -> vector<64x128xf32>
      %62 = tpu.iota {dimensions = array<i32: 1>} : vector<64x128xi32>
      %c125_i32 = arith.constant 125 : i32
      %63 = vector.broadcast %c125_i32 : i32 to vector<64x128xi32>
      %64 = arith.cmpi eq, %62, %63 : vector<64x128xi32>
      %cst_24 = arith.constant 1.000000e+00 : f32
      %65 = vector.broadcast %cst_24 : f32 to vector<64x128xf32>
      %66 = arith.select %64, %65, %61 : vector<64x128xi1>, vector<64x128xf32>
      %67 = vector.extract_strided_slice %66 {offsets = [0, 126], sizes = [64, 1], strides = [1, 1]} : vector<64x128xf32> to vector<64x1xf32>
      %68 = vector.extract_strided_slice %66 {offsets = [0, 127], sizes = [64, 1], strides = [1, 1]} : vector<64x128xf32> to vector<64x1xf32>
      %69 = tpu.transpose %67, [1, 0] : vector<64x1xf32> -> vector<1x64xf32>
      %c0_25 = arith.constant 0 : index
      %c0_26 = arith.constant 0 : index
      %70 = vector.load %arg10[%c0_25, %c0_26] : memref<1x64xf32, #tpu.memory_space<vmem>>, vector<1x64xf32>
      tpu.vector_store %arg10[%c0_25, %c0_26], %69 {strides = array<i32>} : memref<1x64xf32, #tpu.memory_space<vmem>>, vector<1x64xf32>,
      %c0_27 = arith.constant 0 : index
      %c0_28 = arith.constant 0 : index
      %71 = vector.load %arg11[%c0_27, %c0_28] : memref<64x1xf32, #tpu.memory_space<vmem>>, vector<64x1xf32>
      tpu.vector_store %arg11[%c0_27, %c0_28], %68 {strides = array<i32>} : memref<64x1xf32, #tpu.memory_space<vmem>>, vector<64x1xf32>,
      %72 = vector.shape_cast %67 : vector<64x1xf32> to vector<1x64x1xf32>
      %cst_29 = arith.constant dense<0xFF800000> : vector<1xf32>
      %73 = vector.multi_reduction <maximumf>, %72, %cst_29 [1, 2] : vector<1x64x1xf32> to vector<1xf32>
      %74 = vector.shape_cast %73 : vector<1xf32> to vector<1x1x1xf32>
      %75 = vector.extract %74[0, 0, 0] : f32 from vector<1x1x1xf32>
      %76 = vector.broadcast %75 : f32 to vector<64x1xf32>
      %77 = arith.addf %68, %76 : vector<64x1xf32>
      %cst_30 = arith.constant 0.000000e+00 : f32
      %78 = vector.broadcast %cst_30 : f32 to vector<64x1xf32>
      %79 = arith.cmpf ogt, %77, %78 : vector<64x1xf32>
      %cst_31 = arith.constant 2.000000e-01 : f32
      %80 = vector.broadcast %cst_31 : f32 to vector<64x1xf32>
      %81 = arith.mulf %80, %77 : vector<64x1xf32>
      %82 = arith.select %79, %77, %81 : vector<64x1xi1>, vector<64x1xf32>
      %c0_32 = arith.constant 0 : index
      %c0_33 = arith.constant 0 : index
      %83 = vector.load %arg12[%c0_32, %c0_33] : memref<64x1xf32, #tpu.memory_space<vmem>>, vector<64x1xf32>
      tpu.vector_store %arg12[%c0_32, %c0_33], %82 {strides = array<i32>} : memref<64x1xf32, #tpu.memory_space<vmem>>, vector<64x1xf32>,
      %84 = arith.truncf %66 : vector<64x128xf32> to vector<64x128xbf16>
      %c0_34 = arith.constant 0 : index
      %c0_35 = arith.constant 0 : index
      %85 = vector.load %arg9[%c0_34, %c0_35] : memref<64x128xbf16, #tpu.memory_space<vmem>>, vector<64x128xbf16>
      tpu.vector_store %arg9[%c0_34, %c0_35], %84 {strides = array<i32>} : memref<64x128xbf16, #tpu.memory_space<vmem>>, vector<64x128xbf16>,
    } else {
    }
    %c32_i32 = arith.constant 32 : i32
    %3 = arith.muli %arg1, %c32_i32 : i32
    %4 = tpu.assume_multiple %3, 32 : i32
    %5 = arith.index_cast %4 : i32 to index
    %c0 = arith.constant 0 : index
    %6 = vector.load %arg11[%5, %c0] : memref<64x1xf32, #tpu.memory_space<vmem>>, vector<32x1xf32>
    %7 = arith.index_cast %4 : i32 to index
    %c0_1 = arith.constant 0 : index
    %8 = vector.load %arg12[%7, %c0_1] : memref<64x1xf32, #tpu.memory_space<vmem>>, vector<32x1xf32>
    %c0_2 = arith.constant 0 : index
    %c0_3 = arith.constant 0 : index
    %9 = vector.load %arg10[%c0_2, %c0_3] : memref<1x64xf32, #tpu.memory_space<vmem>>, vector<1x64xf32>
    %10 = vector.broadcast %6 : vector<32x1xf32> to vector<32x64xf32>
    %11 = vector.broadcast %9 : vector<1x64xf32> to vector<32x64xf32>
    %12 = arith.addf %10, %11 : vector<32x64xf32>
    %cst = arith.constant 0.000000e+00 : f32
    %13 = vector.broadcast %cst : f32 to vector<32x64xf32>
    %14 = arith.cmpf ogt, %12, %13 : vector<32x64xf32>
    %cst_4 = arith.constant 2.000000e-01 : f32
    %15 = vector.broadcast %cst_4 : f32 to vector<32x64xf32>
    %16 = arith.mulf %15, %12 : vector<32x64xf32>
    %17 = arith.select %14, %12, %16 : vector<32x64xi1>, vector<32x64xf32>
    %18 = vector.broadcast %8 : vector<32x1xf32> to vector<32x64xf32>
    %19 = arith.subf %17, %18 : vector<32x64xf32>
    %20 = math.exp %19 : vector<32x64xf32>
    %c0_5 = arith.constant 0 : index
    %c0_6 = arith.constant 0 : index
    %21 = vector.load %arg3[%c0_5, %c0_6] : memref<32x64xi8, #tpu.memory_space<vmem>>, vector<32x64xi8>
    %22 = arith.sitofp %21 : vector<32x64xi8> to vector<32x64xf32>
    %23 = arith.mulf %20, %22 : vector<32x64xf32>
    %24 = arith.truncf %23 : vector<32x64xf32> to vector<32x64xbf16>
    %c0_7 = arith.constant 0 : index
    %c0_8 = arith.constant 0 : index
    %25 = vector.load %arg9[%c0_7, %c0_8] : memref<64x128xbf16, #tpu.memory_space<vmem>>, vector<64x128xbf16>
    %cst_9 = arith.constant dense<0.000000e+00> : vector<32x128xf32>
    %26 = tpu.matmul %24, %25, %cst_9 {dimension_numbers = #tpu.dot_dimension_numbers<[1], [0], [0], [1], [0, 0, 1, 1], [], []>} : vector<32x64xbf16>, vector<64x128xbf16>, vector<32x128xf32> -> vector<32x128xf32>
    %27 = vector.extract_strided_slice %26 {offsets = [0, 125], sizes = [32, 1], strides = [1, 1]} : vector<32x128xf32> to vector<32x1xf32>
    %cst_10 = arith.constant 1.000000e-30 : f32
    %28 = vector.broadcast %cst_10 : f32 to vector<32x1xf32>
    %29 = arith.maximumf %27, %28 : vector<32x1xf32>
    %30 = tpu.reciprocal %29 {approx = true} : vector<32x1xf32> -> vector<32x1xf32>
    %31 = vector.broadcast %30 : vector<32x1xf32> to vector<32x128xf32>
    %32 = arith.mulf %26, %31 : vector<32x128xf32>
    %33 = arith.index_cast %arg0 : i32 to index
    %c0_11 = arith.constant 0 : index
    %c0_12 = arith.constant 0 : index
    %34 = vector.load %arg6[%33, %c0_11, %c0_12] : memref<3x1x128xf32, #tpu.memory_space<vmem>>, vector<1x1x128xf32>
    %35 = vector.shape_cast %34 : vector<1x1x128xf32> to vector<1x128xf32>
    %36 = vector.broadcast %35 : vector<1x128xf32> to vector<32x128xf32>
    %37 = arith.addf %32, %36 : vector<32x128xf32>
    %c2_i32 = arith.constant 2 : i32
    %38 = arith.cmpi slt, %arg0, %c2_i32 : i32
    %39 = arith.extui %38 : i1 to i32
    %40 = arith.sitofp %39 : i32 to f32
    %cst_13 = arith.constant 0.000000e+00 : f32
    %41 = vector.broadcast %cst_13 : f32 to vector<32x128xf32>
    %42 = arith.minimumf %37, %41 : vector<32x128xf32>
    %43 = vector.broadcast %40 : f32 to vector<32x128xf32>
    %44 = arith.mulf %43, %42 : vector<32x128xf32>
    %45 = arith.subf %37, %44 : vector<32x128xf32>
    %46 = arith.index_cast %4 : i32 to index
    %c0_14 = arith.constant 0 : index
    %47 = vector.load %arg8[%46, %c0_14] : memref<64x128xf32, #tpu.memory_space<vmem>>, vector<32x128xf32>
    tpu.vector_store %arg8[%46, %c0_14], %45 {strides = array<i32>} : memref<64x128xf32, #tpu.memory_space<vmem>>, vector<32x128xf32>,
    %c2_i32_15 = arith.constant 2 : i32
    %48 = arith.cmpi eq, %arg0, %c2_i32_15 : i32
    %c1_i32 = arith.constant 1 : i32
    %49 = arith.cmpi eq, %arg1, %c1_i32 : i32
    %50 = arith.andi %48, %49 : i1
    %51 = arith.extui %50 : i1 to i32
    %c0_i32_16 = arith.constant 0 : i32
    %52 = arith.cmpi ne, %51, %c0_i32_16 : i32
    scf.if %52 {
      %c0_17 = arith.constant 0 : index
      %c0_18 = arith.constant 0 : index
      %53 = vector.load %arg4[%c0_17, %c0_18] : memref<2x64xbf16, #tpu.memory_space<vmem>>, vector<2x64xbf16>
      %c0_19 = arith.constant 0 : index
      %c0_20 = arith.constant 0 : index
      %54 = vector.load %arg8[%c0_19, %c0_20] : memref<64x128xf32, #tpu.memory_space<vmem>>, vector<64x128xf32>
      %55 = arith.truncf %54 : vector<64x128xf32> to vector<64x128xbf16>
      %cst_21 = arith.constant dense<0.000000e+00> : vector<2x128xf32>
      %56 = tpu.matmul %53, %55, %cst_21 {dimension_numbers = #tpu.dot_dimension_numbers<[1], [0], [0], [1], [0, 0, 1, 1], [], []>} : vector<2x64xbf16>, vector<64x128xbf16>, vector<2x128xf32> -> vector<2x128xf32>
      %57 = tpu.iota {dimensions = array<i32: 1>} : vector<2x128xi32>
      %c32_i32_22 = arith.constant 32 : i32
      %58 = vector.broadcast %c32_i32_22 : i32 to vector<2x128xi32>
      %59 = arith.cmpi slt, %57, %58 : vector<2x128xi32>
      %cst_23 = arith.constant 0.000000e+00 : f32
      %60 = vector.broadcast %cst_23 : f32 to vector<2x128xf32>
      %61 = arith.select %59, %56, %60 : vector<2x128xi1>, vector<2x128xf32>
      %62 = arith.mulf %61, %61 : vector<2x128xf32>
      %cst_24 = arith.constant dense<0.000000e+00> : vector<2xf32>
      %63 = vector.multi_reduction <add>, %62, %cst_24 [1] : vector<2x128xf32> to vector<2xf32>
      %64 = vector.shape_cast %63 : vector<2xf32> to vector<2x1xf32>
      %65 = math.sqrt %64 : vector<2x1xf32>
      %cst_25 = arith.constant 9.99999996E-13 : f32
      %66 = vector.broadcast %cst_25 : f32 to vector<2x1xf32>
      %67 = arith.maximumf %65, %66 : vector<2x1xf32>
      %68 = vector.broadcast %67 : vector<2x1xf32> to vector<2x128xf32>
      %69 = arith.divf %61, %68 : vector<2x128xf32>
      %c0_26 = arith.constant 0 : index
      %c0_27 = arith.constant 0 : index
      %70 = vector.load %arg7[%c0_26, %c0_27] : memref<2x128xf32, #tpu.memory_space<vmem>>, vector<2x128xf32>
      tpu.vector_store %arg7[%c0_26, %c0_27], %69 {strides = array<i32>} : memref<2x128xf32, #tpu.memory_space<vmem>>, vector<2x128xf32>,
    } else {
    }
    return
  }
  func.func @transform_0(%arg0: i32, %arg1: i32) -> (i32, i32) {
    %c0_i32 = arith.constant 0 : i32
    %c0_i32_0 = arith.constant 0 : i32
    %c0_i32_1 = arith.constant 0 : i32
    return %c0_i32, %c0_i32_0 : i32, i32
  }
  func.func @transform_1(%arg0: i32, %arg1: i32) -> (i32, i32) {
    %c0_i32 = arith.constant 0 : i32
    %c0_i32_0 = arith.constant 0 : i32
    return %arg1, %c0_i32 : i32, i32
  }
  func.func @transform_2(%arg0: i32, %arg1: i32) -> (i32, i32) {
    %c0_i32 = arith.constant 0 : i32
    %c0_i32_0 = arith.constant 0 : i32
    %c0_i32_1 = arith.constant 0 : i32
    return %c0_i32, %c0_i32_0 : i32, i32
  }
  func.func @transform_3(%arg0: i32, %arg1: i32) -> (i32, i32, i32) {
    %c0_i32 = arith.constant 0 : i32
    %c0_i32_0 = arith.constant 0 : i32
    %c0_i32_1 = arith.constant 0 : i32
    %c0_i32_2 = arith.constant 0 : i32
    return %c0_i32, %c0_i32_0, %c0_i32_1 : i32, i32, i32
  }
  func.func @transform_4(%arg0: i32, %arg1: i32) -> (i32, i32, i32) {
    %c0_i32 = arith.constant 0 : i32
    %c0_i32_0 = arith.constant 0 : i32
    %c0_i32_1 = arith.constant 0 : i32
    %c0_i32_2 = arith.constant 0 : i32
    return %c0_i32, %c0_i32_0, %c0_i32_1 : i32, i32, i32
  }
  func.func @transform_5(%arg0: i32, %arg1: i32) -> (i32, i32) {
    %c0_i32 = arith.constant 0 : i32
    %c0_i32_0 = arith.constant 0 : i32
    %c0_i32_1 = arith.constant 0 : i32
    return %c0_i32, %c0_i32_0 : i32, i32
  }
}

</mosaic_0001>

<llo_original>
// kernel: tpu_custom_call.1
$region0: #{tpu_custom_call.1}
  #allocation0 [shape = 'u32[]', space=smem, size = 0x4, offset = 0x4, fixed_abs, tag = 'smem constant byte address 0x4 - core index']
  #allocation1 [shape = 'u32[144,128]{1,0:T(1,128)}', space=vmem, size = 0x12000, scoped, tag = 'internal scratch']
  #allocation2 [shape = 'f32[64,128]{1,0:T(8,128)}', space=vmem, size = 0x8000, scoped, tag = 'scratch operand']
  #allocation3 [shape = 'bf16[64,128]{1,0:T(16,128)(2,1)}', space=vmem, size = 0x4000, scoped, tag = 'scratch operand']
  #allocation4 [shape = 'f32[1,64]{1,0:T(1,128)}', space=vmem, size = 0x200, scoped, tag = 'scratch operand']
  #allocation5 [shape = 'f32[64,1]{1,0:T(8,128)}', space=vmem, size = 0x8000, scoped, tag = 'scratch operand']
  #allocation6 [shape = 'f32[64,1]{1,0:T(8,128)}', space=vmem, size = 0x8000, scoped, tag = 'scratch operand']
  %s0 = inlined_call_operand.hbm [shape: f32[64,128], index: 0, kind: input, shape index: {}]
  %s1 = inlined_call_operand.hbm [shape: s8[64,64], index: 1, kind: input, shape index: {}]
  %s2 = inlined_call_operand.vmem [shape: bf16[2,64], index: 2, kind: input, shape index: {}]
  %s3 = inlined_call_operand.hbm [shape: bf16[3,128,128], index: 3, kind: input, shape index: {}]
  %s4 = inlined_call_operand.vmem [shape: f32[3,1,128], index: 4, kind: input, shape index: {}]
  %s5 = inlined_call_operand.hbm [shape: f32[2,128], index: 5, kind: output, shape index: {}]
  %s6 = sld [smem:[#allocation0]]
  $region77: #{tpu_custom_call.1} parent=0
    _
  %s8 = ssub.s32 1, %s6
  %s9 = scalar_select 0, %s8, %s6
  $region1: #{tpu_custom_call.1} parent=0
    #allocation7 [shape = 'u8[32768]{0}', space=vmem, size = 0x8000, scoped, tag = 'input window, operand 0, single buffered']
    #allocation8 [shape = 's32[2]{0}', space=sflag, size = 0x8, scoped, tag = 'scoped memory for tpu_custom_call.1']
    #allocation9 [shape = 's32[2]{0}', space=sflag, size = 0x8, scoped, tag = 'scoped memory for tpu_custom_call.1']
    #allocation10 [shape = 'u8[8192]{0}', space=vmem, size = 0x2000, scoped, tag = 'input window, operand 1']
    #allocation11 [shape = 's32[2]{0}', space=sflag, size = 0x8, scoped, tag = 'scoped memory for tpu_custom_call.1']
    #allocation12 [shape = 'u8[98304]{0}', space=vmem, size = 0x18000, scoped, tag = 'input window, operand 3, single buffered']
    #allocation13 [shape = 'u8[1024]{0}', space=vmem, size = 0x400, scoped, tag = 'output window, operand 0, single buffered']
    %10 = vsyncpa [#allocation8], 0
    %11 = vsyncpa [#allocation11], 0
    %s12 = scalar_lea.sflag [#allocation11], 1
    %13 = vsyncpa %s12, 0
    %14 = vsyncpa [#allocation9], 0
    loop: start=0, step=1, limit=8
    $region2: #{tpu_custom_call.1} parent=1 // loop_pre_header
      _
    $region3: #{tpu_custom_call.1} parent=1 // loop_header
      %s16 = sphi 0, %s20
      %p17 = scmp.ge.s32.totalorder %s16, 8
      %s23 = sphi 0, %s35
      %s24 = sphi 0, %s31
      %s25 = sphi 0, %s23
      %s26 = sphi 0, %s24
      %s27 = sphi 0, %s25
      %s28 = sphi 0, %s26
      %s36 = sphi 0, %s36
      %s38 = sphi 0, %s36
      %s39 = sphi 0, %s38
      %s53 = sphi 0, %s39
      %s59 = sphi 0, %s61
      %s62 = sphi 0, %s59
      %s63 = sphi 0, %s62
      %s79 = sphi 0, %s63
      %s83 = sphi 0, %s83
      %s85 = sphi 0, %s83
      %s86 = sphi 0, %s85
      %s100 = sphi 0, %s86
      %s104 = sphi 0, %s104
      %s106 = sphi 0, %s104
      %s107 = sphi 0, %s106
      %s121 = sphi 0, %s107
      %s125 = sphi 0, %s125
      %s127 = sphi 0, %s125
      %s128 = sphi 0, %s127
      %s142 = sphi 0, %s128
      %s146 = sphi 0, %s146
      %s148 = sphi 0, %s146
      %s149 = sphi 0, %s148
      %s163 = sphi 0, %s149
    $region4: #{tpu_custom_call.1} parent=1 // loop_header_branch
      %19 = sbr.rel (%p17) target = $region8
    $region5: #{tpu_custom_call.1} parent=1 // loop_body
      %s21 = ssub.s32 %s16, 1
      %s22 = ssub.s32 %s16, 2
      %s29 = sadd.s32 1, %s24
      %p30 = scmp.ge.s32.totalorder %s29, 2
      %s31 = scalar_select %p30, 0, %s29
      %s32 = sadd.s32 1, %s23
      %s33 = scalar_select %p30, %s32, %s23
      %p34 = scmp.ge.s32.totalorder %s33, 3
      %s35 = scalar_select %p34, 0, %s33
      %s37 = sadd.s32 %s36, 1
      %p40 = scmp.eq.s32.totalorder %s16, 5
      %p41 = scmp.ne.s32.totalorder %s36, %s38
      %p42 = scmp.eq.s32.totalorder %s16, 0
      %p43 = por %p41, %p42
      %p44 = scmp.ne.s32.totalorder %s36, %s38
      %p45 = scmp.eq.s32.totalorder %s21, 5
      %p46 = por %p44, %p45
      %p47 = scmp.ne.s32.totalorder %s38, %s39
      %p48 = scmp.eq.s32.totalorder %s21, 0
      %p49 = por %p47, %p48
      %p50 = scmp.ne.s32.totalorder %s38, %s39
      %p51 = scmp.eq.s32.totalorder %s22, 5
      %p52 = por %p50, %p51
      %p54 = scmp.ne.s32.totalorder %s39, %s53
      %p55 = scmp.eq.s32.totalorder %s22, 0
      %p56 = por %p54, %p55
      %s57 = ssub.s32 %s24, %s31
      %p58 = scmp.eq.s32.totalorder %s57, 0
      %s60 = sadd.s32 %s59, 1
      %s61 = scalar_select %p58, %s59, %s60
      %p64 = pneg %p58
      %p65 = scmp.eq.s32.totalorder %s16, 5
      %p66 = por %p64, %p65
      %p67 = scmp.ne.s32.totalorder %s59, %s62
      %p68 = scmp.eq.s32.totalorder %s16, 0
      %p69 = por %p67, %p68
      %p70 = scmp.ne.s32.totalorder %s59, %s62
      %p71 = scmp.eq.s32.totalorder %s21, 5
      %p72 = por %p70, %p71
      %p73 = scmp.ne.s32.totalorder %s62, %s63
      %p74 = scmp.eq.s32.totalorder %s21, 0
      %p75 = por %p73, %p74
      %p76 = scmp.ne.s32.totalorder %s62, %s63
      %p77 = scmp.eq.s32.totalorder %s22, 5
      %p78 = por %p76, %p77
      %p80 = scmp.ne.s32.totalorder %s63, %s79
      %p81 = scmp.eq.s32.totalorder %s22, 0
      %p82 = por %p80, %p81
      %s84 = sadd.s32 %s83, 1
      %p87 = scmp.eq.s32.totalorder %s16, 5
      %p88 = scmp.ne.s32.totalorder %s83, %s85
      %p89 = scmp.eq.s32.totalorder %s16, 0
      %p90 = por %p88, %p89
      %p91 = scmp.ne.s32.totalorder %s83, %s85
      %p92 = scmp.eq.s32.totalorder %s21, 5
      %p93 = por %p91, %p92
      %p94 = scmp.ne.s32.totalorder %s85, %s86
      %p95 = scmp.eq.s32.totalorder %s21, 0
      %p96 = por %p94, %p95
      %p97 = scmp.ne.s32.totalorder %s85, %s86
      %p98 = scmp.eq.s32.totalorder %s22, 5
      %p99 = por %p97, %p98
      %p101 = scmp.ne.s32.totalorder %s86, %s100
      %p102 = scmp.eq.s32.totalorder %s22, 0
      %p103 = por %p101, %p102
      %s105 = sadd.s32 %s104, 1
      %p108 = scmp.eq.s32.totalorder %s16, 5
      %p109 = scmp.ne.s32.totalorder %s104, %s106
      %p110 = scmp.eq.s32.totalorder %s16, 0
      %p111 = por %p109, %p110
      %p112 = scmp.ne.s32.totalorder %s104, %s106
      %p113 = scmp.eq.s32.totalorder %s21, 5
      %p114 = por %p112, %p113
      %p115 = scmp.ne.s32.totalorder %s106, %s107
      %p116 = scmp.eq.s32.totalorder %s21, 0
      %p117 = por %p115, %p116
      %p118 = scmp.ne.s32.totalorder %s106, %s107
      %p119 = scmp.eq.s32.totalorder %s22, 5
      %p120 = por %p118, %p119
      %p122 = scmp.ne.s32.totalorder %s107, %s121
      %p123 = scmp.eq.s32.totalorder %s22, 0
      %p124 = por %p122, %p123
      %s126 = sadd.s32 %s125, 1
      %p129 = scmp.eq.s32.totalorder %s16, 5
      %p130 = scmp.ne.s32.totalorder %s125, %s127
      %p131 = scmp.eq.s32.totalorder %s16, 0
      %p132 = por %p130, %p131
      %p133 = scmp.ne.s32.totalorder %s125, %s127
      %p134 = scmp.eq.s32.totalorder %s21, 5
      %p135 = por %p133, %p134
      %p136 = scmp.ne.s32.totalorder %s127, %s128
      %p137 = scmp.eq.s32.totalorder %s21, 0
      %p138 = por %p136, %p137
      %p139 = scmp.ne.s32.totalorder %s127, %s128
      %p140 = scmp.eq.s32.totalorder %s22, 5
      %p141 = por %p139, %p140
      %p143 = scmp.ne.s32.totalorder %s128, %s142
      %p144 = scmp.eq.s32.totalorder %s22, 0
      %p145 = por %p143, %p144
      %s147 = sadd.s32 %s146, 1
      %p150 = scmp.eq.s32.totalorder %s16, 5
      %p151 = scmp.ne.s32.totalorder %s146, %s148
      %p152 = scmp.eq.s32.totalorder %s16, 0
      %p153 = por %p151, %p152
      %p154 = scmp.ne.s32.totalorder %s146, %s148
      %p155 = scmp.eq.s32.totalorder %s21, 5
      %p156 = por %p154, %p155
      %p157 = scmp.ne.s32.totalorder %s148, %s149
      %p158 = scmp.eq.s32.totalorder %s21, 0
      %p159 = por %p157, %p158
      %p160 = scmp.ne.s32.totalorder %s148, %s149
      %p161 = scmp.eq.s32.totalorder %s22, 5
      %p162 = por %p160, %p161
      %p164 = scmp.ne.s32.totalorder %s149, %s163
      %p165 = scmp.eq.s32.totalorder %s22, 0
      %p166 = por %p164, %p165
      %p167 = scmp.le.s32.totalorder 1, %s16
      %p168 = scmp.lt.s32.totalorder %s16, 7
      %p169 = pnand %p167, %p168
      %p170 = pneg %p169
      // Predicated region
      $region9: #{tpu_custom_call.1} parent=5 // pred_check
        _
      $region10: #{tpu_custom_call.1} parent=5 // pred_check_branch
        %172 = sbr.rel (%p169) target = $region12
      $region11: #{tpu_custom_call.1} parent=5 // pred_region
        %s173 = ssub.s32 %s16, 1
        // Predicated region
        $region13: #{tpu_custom_call.1} parent=11 // pred_check
          %p174 = pneg %p49
        $region14: #{tpu_custom_call.1} parent=11 // pred_check_branch
          %176 = sbr.rel (%p174) target = $region16
        $region15: #{tpu_custom_call.1} parent=11 // pred_region
          %s178 = ssub.s32 1024, 1024
          %179 = vsyncadd [#allocation8], %s178
          %s180 = sshll.u32 [#allocation7], 4
          %s181 = int_to_ptr.vmem [resolvable:$true] %s180
          %186 = dma.hbm_to_vmem [thread:$0]  %s0, 1024, %s181, [#allocation8], 128, 128, 8
        $region16: #{tpu_custom_call.1} parent=11 // pred_fallthru
          _
        // Predicated region
        $region17: #{tpu_custom_call.1} parent=11 // pred_check
          %p187 = pneg %p96
        $region18: #{tpu_custom_call.1} parent=11 // pred_check_branch
          %189 = sbr.rel (%p187) target = $region20
        $region19: #{tpu_custom_call.1} parent=11 // pred_region
          _
        $region20: #{tpu_custom_call.1} parent=11 // pred_fallthru
          _
        // Predicated region
        $region21: #{tpu_custom_call.1} parent=11 // pred_check
          %p190 = pneg %p117
        $region22: #{tpu_custom_call.1} parent=11 // pred_check_branch
          %192 = sbr.rel (%p190) target = $region24
        $region23: #{tpu_custom_call.1} parent=11 // pred_region
          %s194 = ssub.s32 3072, 3072
          %195 = vsyncadd [#allocation11], %s194
          %s196 = sshll.u32 [#allocation12], 4
          %s197 = int_to_ptr.vmem [resolvable:$true] %s196
          %202 = dma.hbm_to_vmem [thread:$0]  %s3, 3072, %s197, [#allocation11], 64, 64, 4
        $region24: #{tpu_custom_call.1} parent=11 // pred_fallthru
          _
        // Predicated region
        $region25: #{tpu_custom_call.1} parent=11 // pred_check
          %p203 = pneg %p138
        $region26: #{tpu_custom_call.1} parent=11 // pred_check_branch
          %205 = sbr.rel (%p203) target = $region28
        $region27: #{tpu_custom_call.1} parent=11 // pred_region
          _
        $region28: #{tpu_custom_call.1} parent=11 // pred_fallthru
          _
      $region12: #{tpu_custom_call.1} parent=5 // pred_fallthru
        _
      %p206 = scmp.lt.s32.totalorder %s16, 6
      // Predicated region
      $region29: #{tpu_custom_call.1} parent=5 // pred_check
        %p207 = pneg %p206
      $region30: #{tpu_custom_call.1} parent=5 // pred_check_branch
        %209 = sbr.rel (%p207) target = $region32
      $region31: #{tpu_custom_call.1} parent=5 // pred_region
        // Predicated region
        $region33: #{tpu_custom_call.1} parent=31 // pred_check
          %p210 = pneg %p69
        $region34: #{tpu_custom_call.1} parent=31 // pred_check_branch
          %212 = sbr.rel (%p210) target = $region36
        $region35: #{tpu_custom_call.1} parent=31 // pred_region
          %s213 = sand.u32 %s16, 1
          %s214 = scalar_lea.sflag [#allocation11], %s213
          %s215 = sand.u32 %s59, 1
          %s216 = smul.addr %s215, 8
          %s217 = scalar_lea.vmem [#allocation10], %s216
          %s219 = ssub.s32 128, 128
          %220 = vsyncadd %s214, %s219
          %s221 = smul.addr %s24, 128
          %s222 = scalar_lea.hbm %s1, %s221
          %s224 = sshll.u32 %s217, 4
          %s225 = int_to_ptr.vmem [resolvable:$true] %s224
          %227 = dma.hbm_to_vmem [thread:$0]  %s222, 128, %s225, %s214
        $region36: #{tpu_custom_call.1} parent=31 // pred_fallthru
          _
      $region32: #{tpu_custom_call.1} parent=5 // pred_fallthru
        _
      %p228 = scmp.le.s32.totalorder 1, %s16
      %p229 = scmp.lt.s32.totalorder %s16, 7
      %p230 = pnand %p228, %p229
      %p231 = pneg %p230
      // Predicated region
      $region37: #{tpu_custom_call.1} parent=5 // pred_check
        _
      $region38: #{tpu_custom_call.1} parent=5 // pred_check_branch
        %233 = sbr.rel (%p230) target = $region40
      $region39: #{tpu_custom_call.1} parent=5 // pred_region
        %s234 = ssub.s32 %s16, 1
        // Predicated region
        $region41: #{tpu_custom_call.1} parent=39 // pred_check
          %p235 = pneg %p49
        $region42: #{tpu_custom_call.1} parent=39 // pred_check_branch
          %237 = sbr.rel (%p235) target = $region44
        $region43: #{tpu_custom_call.1} parent=39 // pred_region
          %238 = dma.done [#allocation8], 1024
        $region44: #{tpu_custom_call.1} parent=39 // pred_fallthru
          _
        %s239 = sand.u32 %s21, 1
        %s240 = scalar_lea.sflag [#allocation11], %s239
        %s241 = sand.u32 %s62, 1
        %s242 = smul.addr %s241, 8
        %s243 = scalar_lea.vmem [#allocation10], %s242
        // Predicated region
        $region45: #{tpu_custom_call.1} parent=39 // pred_check
          %p244 = pneg %p75
        $region46: #{tpu_custom_call.1} parent=39 // pred_check_branch
          %246 = sbr.rel (%p244) target = $region48
        $region47: #{tpu_custom_call.1} parent=39 // pred_region
          %247 = dma.done %s240, 128
        $region48: #{tpu_custom_call.1} parent=39 // pred_fallthru
          _
        // Predicated region
        $region49: #{tpu_custom_call.1} parent=39 // pred_check
          %p248 = pneg %p117
        $region50: #{tpu_custom_call.1} parent=39 // pred_check_branch
          %250 = sbr.rel (%p248) target = $region52
        $region51: #{tpu_custom_call.1} parent=39 // pred_region
          %251 = dma.done [#allocation11], 3072
        $region52: #{tpu_custom_call.1} parent=39 // pred_fallthru
          _
        %p252 = pneg %p49
        %p253 = pneg %p46
        %s254 = sand.u32 %s21, 1
        %s255 = scalar_lea.sflag [#allocation11], %s254
        %s256 = sand.u32 %s62, 1
        %s257 = smul.addr %s256, 8
        %s258 = scalar_lea.vmem [#allocation10], %s257
        %p259 = pneg %p75
        %p260 = pneg %p72
        %p261 = pneg %p96
        %p262 = pneg %p93
        %p263 = pneg %p117
        %p264 = pneg %p114
        %p265 = pneg %p138
        %p266 = pneg %p135
        %p267 = pneg %p159
        %p268 = pneg %p156
        %p270 = scmp.eq.s32.totalorder %s26, 0
        // Predicated region
        $region53: #{tpu_custom_call.1} parent=39 // pred_check
          %p271 = pneg %p270
        $region54: #{tpu_custom_call.1} parent=39 // pred_check_branch
          %273 = sbr.rel (%p271) target = $region56
        $region55: #{tpu_custom_call.1} parent=39 // pred_region
          %p274 = scmp.eq.s32.totalorder %s25, 0
          // Predicated region
          $region57: #{tpu_custom_call.1} parent=55 // pred_check
            %p275 = pneg %p274
          $region58: #{tpu_custom_call.1} parent=55 // pred_check_branch
            %277 = sbr.rel (%p275) target = $region60
          $region59: #{tpu_custom_call.1} parent=55 // pred_region
            %v278 = vld [vmem:[#allocation7] sm:$0xff]
            %v279 = vld [vmem:[#allocation7 + $0x8] sm:$0xff]
            %v280 = vld [vmem:[#allocation7 + $0x10] sm:$0xff]
            %v281 = vld [vmem:[#allocation7 + $0x18] sm:$0xff]
            %v282 = vld [vmem:[#allocation7 + $0x20] sm:$0xff]
            %v283 = vld [vmem:[#allocation7 + $0x28] sm:$0xff]
            %v284 = vld [vmem:[#allocation7 + $0x30] sm:$0xff]
            %v285 = vld [vmem:[#allocation7 + $0x38] sm:$0xff]
            %286 = vst [vmem:[#allocation2] sm:$0xff] %v278
            %287 = vst [vmem:[#allocation2 + $0x8] sm:$0xff] %v279
            %288 = vst [vmem:[#allocation2 + $0x10] sm:$0xff] %v280
            %289 = vst [vmem:[#allocation2 + $0x18] sm:$0xff] %v281
            %290 = vst [vmem:[#allocation2 + $0x20] sm:$0xff] %v282
            %291 = vst [vmem:[#allocation2 + $0x28] sm:$0xff] %v283
            %292 = vst [vmem:[#allocation2 + $0x30] sm:$0xff] %v284
            %293 = vst [vmem:[#allocation2 + $0x38] sm:$0xff] %v285
          $region60: #{tpu_custom_call.1} parent=55 // pred_fallthru
            _
          %v294 = vld [vmem:[#allocation2] sm:$0xff]
          %v295 = vld [vmem:[#allocation2 + $0x8] sm:$0xff]
          %v296 = vld [vmem:[#allocation2 + $0x10] sm:$0xff]
          %v297 = vld [vmem:[#allocation2 + $0x18] sm:$0xff]
          %v298 = vld [vmem:[#allocation2 + $0x20] sm:$0xff]
          %v299 = vld [vmem:[#allocation2 + $0x28] sm:$0xff]
          %v300 = vld [vmem:[#allocation2 + $0x30] sm:$0xff]
          %v301 = vld [vmem:[#allocation2 + $0x38] sm:$0xff]
          %v302 = vpack.c.bf16 %v295, %v294
          %v303 = vpack.c.bf16 %v297, %v296
          %v304 = vpack.c.bf16 %v299, %v298
          %v305 = vpack.c.bf16 %v301, %v300
          %s306 = smul.u32 %s25, 16
          %s307 = smul.addr %s306, 4
          %s308 = scalar_lea.vmem [#allocation12], %s307
          %v309 = vld [vmem:[%s308] sm:$0xf]
          %v310 = vld [vmem:[%s308 + $0x4] sm:$0xf]
          %v311 = vld [vmem:[%s308 + $0x8] sm:$0xf]
          %v312 = vld [vmem:[%s308 + $0xc] sm:$0xf]
          %v313 = vld [vmem:[%s308 + $0x10] sm:$0xf]
          %v314 = vld [vmem:[%s308 + $0x14] sm:$0xf]
          %v315 = vld [vmem:[%s308 + $0x18] sm:$0xf]
          %v316 = vld [vmem:[%s308 + $0x1c] sm:$0xf]
          %v317 = vld [vmem:[%s308 + $0x20] sm:$0xf]
          %v318 = vld [vmem:[%s308 + $0x24] sm:$0xf]
          %v319 = vld [vmem:[%s308 + $0x28] sm:$0xf]
          %v320 = vld [vmem:[%s308 + $0x2c] sm:$0xf]
          %v321 = vld [vmem:[%s308 + $0x30] sm:$0xf]
          %v322 = vld [vmem:[%s308 + $0x34] sm:$0xf]
          %v323 = vld [vmem:[%s308 + $0x38] sm:$0xf]
          %v324 = vld [vmem:[%s308 + $0x3c] sm:$0xf]
          %v341 = vunpack.c.l.b16 %v309
          %v342 = vunpack.c.l.b16 %v310
          %v343 = vunpack.c.l.b16 %v311
          %v344 = vunpack.c.l.b16 %v312
          %v345 = vunpack.c.l.b16 %v313
          %v346 = vunpack.c.l.b16 %v314
          %v347 = vunpack.c.l.b16 %v315
          %v348 = vunpack.c.l.b16 %v316
          %v349 = vunpack.c.l.b16 %v317
          %v350 = vunpack.c.l.b16 %v318
          %v351 = vunpack.c.l.b16 %v319
          %v352 = vunpack.c.l.b16 %v320
          %v353 = vunpack.c.l.b16 %v321
          %v354 = vunpack.c.l.b16 %v322
          %v355 = vunpack.c.l.b16 %v323
          %v356 = vunpack.c.l.b16 %v324
          %v357 = vpack.c.b16 %v342, %v341
          %v358 = vpack.c.b16 %v344, %v343
          %v359 = vpack.c.b16 %v346, %v345
          %v360 = vpack.c.b16 %v348, %v347
          %v361 = vpack.c.b16 %v350, %v349
          %v362 = vpack.c.b16 %v352, %v351
          %v363 = vpack.c.b16 %v354, %v353
          %v364 = vpack.c.b16 %v356, %v355
          %373 = vmatprep.subr.bf16.mxu0 0
          %374 = vmatpush1.bf16.msra.mxu0 %v357
          %375 = vmatprep.subr.bf16.mxu0 0
          %376 = vmatpush1.bf16.msra.mxu0 %v358
          %377 = vmatprep.subr.bf16.mxu0 0
          %378 = vmatpush1.bf16.msra.mxu0 %v359
          %379 = vmatprep.subr.bf16.mxu0 0
          %380 = vmatpush1.bf16.msra.mxu0 %v360
          %381 = vmatprep.subr.bf16.mxu0 0
          %382 = vmatpush1.bf16.msra.mxu0 %v361
          %383 = vmatprep.subr.bf16.mxu0 0
          %384 = vmatpush1.bf16.msra.mxu0 %v362
          %385 = vmatprep.subr.bf16.mxu0 0
          %386 = vmatpush1.bf16.msra.mxu0 %v363
          %387 = vmatprep.subr.bf16.mxu0 0
          %388 = vmatpush1.bf16.msra.mxu0 %v364
          %389 = vmatprep.subr.bf16.mxu0 0
          %390 = vmatpush1.bf16.msra.mxu0 0
          %391 = vmatprep.subr.bf16.mxu0 0
          %392 = vmatpush1.bf16.msra.mxu0 0
          %393 = vmatprep.subr.bf16.mxu0 0
          %394 = vmatpush1.bf16.msra.mxu0 0
          %395 = vmatprep.subr.bf16.mxu0 0
          %396 = vmatpush1.bf16.msra.mxu0 0
          %397 = vmatprep.subr.bf16.mxu0 0
          %398 = vmatpush1.bf16.msra.mxu0 0
          %399 = vmatprep.subr.bf16.mxu0 0
          %400 = vmatpush1.bf16.msra.mxu0 0
          %401 = vmatprep.subr.bf16.mxu0 0
          %402 = vmatpush1.bf16.msra.mxu0 0
          %403 = vmatprep.subr.bf16.mxu0 0
          %404 = vmatpush1.bf16.msra.mxu0 0
          %405 = vmatprep.mubr.bf16.mxu0 0
          %406 = vmatmul.mubr.bf16.gmra.mrb[0].mxu0 %v302
          %v407 = vpop.f32.mrb[0].mxu0
          %v408 = vadd.f32 0.0, %v407
          %v409 = vpop.f32.mrb[0].mxu0
          %v410 = vpop.f32.mrb[0].mxu0
          %v411 = vadd.f32 0.0, %v410
          %v412 = vpop.f32.mrb[0].mxu0
          %413 = vmatprep.mubr.bf16.mxu0 0
          %414 = vmatmul.mubr.bf16.gmra.mrb[0].mxu0 %v303
          %v415 = vpop.f32.mrb[0].mxu0
          %v416 = vadd.f32 0.0, %v415
          %v417 = vpop.f32.mrb[0].mxu0
          %v418 = vpop.f32.mrb[0].mxu0
          %v419 = vadd.f32 0.0, %v418
          %v420 = vpop.f32.mrb[0].mxu0
          %421 = vmatprep.mubr.bf16.mxu0 0
          %422 = vmatmul.mubr.bf16.gmra.mrb[0].mxu0 %v304
          %v423 = vpop.f32.mrb[0].mxu0
          %v424 = vadd.f32 0.0, %v423
          %v425 = vpop.f32.mrb[0].mxu0
          %v426 = vpop.f32.mrb[0].mxu0
          %v427 = vadd.f32 0.0, %v426
          %v428 = vpop.f32.mrb[0].mxu0
          %429 = vmatprep.mubr.bf16.mxu0 0
          %430 = vmatmul.mubr.bf16.gmra.mrb[0].mxu0 %v305
          %v431 = vpop.f32.mrb[0].mxu0
          %v432 = vadd.f32 0.0, %v431
          %v433 = vpop.f32.mrb[0].mxu0
          %v434 = vpop.f32.mrb[0].mxu0
          %v435 = vadd.f32 0.0, %v434
          %v436 = vpop.f32.mrb[0].mxu0
          %437 = vdwg.mxu0
          %v438 = vlaneseq
          %v439 = vand.u32 %v438, 127
          %vm440 = vcmp.eq.s32.totalorder %v439, 125
          %v441 = vsel %vm440, 1.0, %v408
          %v442 = vsel %vm440, 1.0, %v411
          %v443 = vsel %vm440, 1.0, %v416
          %v444 = vsel %vm440, 1.0, %v419
          %v445 = vsel %vm440, 1.0, %v424
          %v446 = vsel %vm440, 1.0, %v427
          %v447 = vsel %vm440, 1.0, %v432
          %v448 = vsel %vm440, 1.0, %v435
          %457 = vrot.lane.b32.xlu0 %v441, 2
          %v458 = vpop.permute.xlu0 %457
          %459 = vrot.lane.b32.xlu0 %v442, 2
          %v460 = vpop.permute.xlu0 %459
          %461 = vrot.lane.b32.xlu0 %v443, 2
          %v462 = vpop.permute.xlu0 %461
          %463 = vrot.lane.b32.xlu0 %v444, 2
          %v464 = vpop.permute.xlu0 %463
          %465 = vrot.lane.b32.xlu0 %v445, 2
          %v466 = vpop.permute.xlu0 %465
          %467 = vrot.lane.b32.xlu0 %v446, 2
          %v468 = vpop.permute.xlu0 %467
          %469 = vrot.lane.b32.xlu0 %v447, 2
          %v470 = vpop.permute.xlu0 %469
          %471 = vrot.lane.b32.xlu0 %v448, 2
          %v472 = vpop.permute.xlu0 %471
          %481 = vxpose.xlu0.b32.start [1/16] %v458, 128
          %482 = vxpose.xlu0.b32.cont [2/16] %v460, 128
          %483 = vxpose.xlu0.b32.cont [3/16] %v462, 128
          %484 = vxpose.xlu0.b32.cont [4/16] %v464, 128
          %485 = vxpose.xlu0.b32.cont [5/16] %v466, 128
          %486 = vxpose.xlu0.b32.cont [6/16] %v468, 128
          %487 = vxpose.xlu0.b32.cont [7/16] %v470, 128
          %488 = vxpose.xlu0.b32.cont [8/16] %v472, 128
          %489 = vxpose.xlu0.b32.cont [9/16] 0.0, 128
          %490 = vxpose.xlu0.b32.cont [10/16] 0.0, 128
          %491 = vxpose.xlu0.b32.cont [11/16] 0.0, 128
          %492 = vxpose.xlu0.b32.cont [12/16] 0.0, 128
          %493 = vxpose.xlu0.b32.cont [13/16] 0.0, 128
          %494 = vxpose.xlu0.b32.cont [14/16] 0.0, 128
          %495 = vxpose.xlu0.b32.cont [15/16] 0.0, 128
          %496 = vxpose.xlu0.b32.end [16/16] 0.0, 128
          %v497 = vpop.trf.xlu0
          %v498 = vpop.trf.xlu0
          %v499 = vpop.trf.xlu0
          %v500 = vpop.trf.xlu0
          %v501 = vpop.trf.xlu0
          %v502 = vpop.trf.xlu0
          %v503 = vpop.trf.xlu0
          %v504 = vpop.trf.xlu0
          %v505 = vpop.trf.xlu0
          %v506 = vpop.trf.xlu0
          %v507 = vpop.trf.xlu0
          %v508 = vpop.trf.xlu0
          %v509 = vpop.trf.xlu0
          %v510 = vpop.trf.xlu0
          %v511 = vpop.trf.xlu0
          %v512 = vpop.trf.xlu0
          %vm513 = vcmask 516096
          %514 = vst.msk [vmem:[#allocation4] sm:$0x1] %vm513, %v497
          %515 = vrot.lane.b32.xlu0 %v441, 1
          %v516 = vpop.permute.xlu0 %515
          %517 = vrot.lane.b32.xlu0 %v442, 1
          %v518 = vpop.permute.xlu0 %517
          %519 = vrot.lane.b32.xlu0 %v443, 1
          %v520 = vpop.permute.xlu0 %519
          %521 = vrot.lane.b32.xlu0 %v444, 1
          %v522 = vpop.permute.xlu0 %521
          %523 = vrot.lane.b32.xlu0 %v445, 1
          %v524 = vpop.permute.xlu0 %523
          %525 = vrot.lane.b32.xlu0 %v446, 1
          %v526 = vpop.permute.xlu0 %525
          %527 = vrot.lane.b32.xlu0 %v447, 1
          %v528 = vpop.permute.xlu0 %527
          %529 = vrot.lane.b32.xlu0 %v448, 1
          %v530 = vpop.permute.xlu0 %529
          %vm539 = vcmask 7168
          %540 = vst.msk [vmem:[#allocation5] sm:$0xff] %vm539, %v516
          %541 = vst.msk [vmem:[#allocation5 + $0x8] sm:$0xff] %vm539, %v518
          %542 = vst.msk [vmem:[#allocation5 + $0x10] sm:$0xff] %vm539, %v520
          %543 = vst.msk [vmem:[#allocation5 + $0x18] sm:$0xff] %vm539, %v522
          %544 = vst.msk [vmem:[#allocation5 + $0x20] sm:$0xff] %vm539, %v524
          %545 = vst.msk [vmem:[#allocation5 + $0x28] sm:$0xff] %vm539, %v526
          %546 = vst.msk [vmem:[#allocation5 + $0x30] sm:$0xff] %vm539, %v528
          %547 = vst.msk [vmem:[#allocation5 + $0x38] sm:$0xff] %vm539, %v530
          %vm548 = vcmask 1040368
          %v549 = vsel %vm548, %v441, -inf
          %v550 = vsel %vm548, %v442, -inf
          %v551 = vsel %vm548, %v443, -inf
          %v552 = vsel %vm548, %v444, -inf
          %v553 = vsel %vm548, %v445, -inf
          %v554 = vmax.f32 %v549, %v553
          %v555 = vsel %vm548, %v446, -inf
          %v556 = vmax.f32 %v550, %v555
          %v557 = vsel %vm548, %v447, -inf
          %v558 = vmax.f32 %v551, %v557
          %v559 = vsel %vm548, %v448, -inf
          %v560 = vmax.f32 %v552, %v559
          %v561 = vmax.f32 %v554, %v556
          %v562 = vmax.f32 %v558, %v560
          %v563 = vmax.f32 %v561, %v562
          %564 = vmax.xlane.f32.xlu0 %v563
          %v565 = vpop.xlane.xlu0 %564
          %v566 = vrot.slane %v565, 4
          %v567 = vmax.f32 %v565, %v566
          %v568 = vrot.slane %v567, 2
          %v569 = vmax.f32 %v567, %v568
          %v570 = vrot.slane %v569, 1
          %v571 = vmax.f32 %v569, %v570
          %s572 = vtos %v571
          %v573 = vstv %s572
          %v574 = vadd.f32 %v441, %v573
          %v575 = vadd.f32 %v442, %v573
          %v576 = vadd.f32 %v443, %v573
          %v577 = vadd.f32 %v444, %v573
          %v578 = vadd.f32 %v445, %v573
          %v579 = vadd.f32 %v446, %v573
          %v580 = vadd.f32 %v447, %v573
          %v581 = vadd.f32 %v448, %v573
          %vm582 = vcmp.gt.f32.partialorder %v574, 0.0
          %vm583 = vcmp.gt.f32.partialorder %v575, 0.0
          %vm584 = vcmp.gt.f32.partialorder %v576, 0.0
          %vm585 = vcmp.gt.f32.partialorder %v577, 0.0
          %vm586 = vcmp.gt.f32.partialorder %v578, 0.0
          %vm587 = vcmp.gt.f32.partialorder %v579, 0.0
          %vm588 = vcmp.gt.f32.partialorder %v580, 0.0
          %vm589 = vcmp.gt.f32.partialorder %v581, 0.0
          %v590 = vmul.f32 %v574, 0.2
          %v591 = vmul.f32 %v575, 0.2
          %v592 = vmul.f32 %v576, 0.2
          %v593 = vmul.f32 %v577, 0.2
          %v594 = vmul.f32 %v578, 0.2
          %v595 = vmul.f32 %v579, 0.2
          %v596 = vmul.f32 %v580, 0.2
          %v597 = vmul.f32 %v581, 0.2
          %v598 = vsel %vm582, %v574, %v590
          %v599 = vsel %vm583, %v575, %v591
          %v600 = vsel %vm584, %v576, %v592
          %v601 = vsel %vm585, %v577, %v593
          %v602 = vsel %vm586, %v578, %v594
          %v603 = vsel %vm587, %v579, %v595
          %v604 = vsel %vm588, %v580, %v596
          %v605 = vsel %vm589, %v581, %v597
          %614 = vrot.lane.b32.xlu0 %v598, 1
          %v615 = vpop.permute.xlu0 %614
          %616 = vrot.lane.b32.xlu0 %v599, 1
          %v617 = vpop.permute.xlu0 %616
          %618 = vrot.lane.b32.xlu0 %v600, 1
          %v619 = vpop.permute.xlu0 %618
          %620 = vrot.lane.b32.xlu0 %v601, 1
          %v621 = vpop.permute.xlu0 %620
          %622 = vrot.lane.b32.xlu0 %v602, 1
          %v623 = vpop.permute.xlu0 %622
          %624 = vrot.lane.b32.xlu0 %v603, 1
          %v625 = vpop.permute.xlu0 %624
          %626 = vrot.lane.b32.xlu0 %v604, 1
          %v627 = vpop.permute.xlu0 %626
          %628 = vrot.lane.b32.xlu0 %v605, 1
          %v629 = vpop.permute.xlu0 %628
          %638 = vst.msk [vmem:[#allocation6] sm:$0xff] %vm539, %v615
          %639 = vst.msk [vmem:[#allocation6 + $0x8] sm:$0xff] %vm539, %v617
          %640 = vst.msk [vmem:[#allocation6 + $0x10] sm:$0xff] %vm539, %v619
          %641 = vst.msk [vmem:[#allocation6 + $0x18] sm:$0xff] %vm539, %v621
          %642 = vst.msk [vmem:[#allocation6 + $0x20] sm:$0xff] %vm539, %v623
          %643 = vst.msk [vmem:[#allocation6 + $0x28] sm:$0xff] %vm539, %v625
          %644 = vst.msk [vmem:[#allocation6 + $0x30] sm:$0xff] %vm539, %v627
          %645 = vst.msk [vmem:[#allocation6 + $0x38] sm:$0xff] %vm539, %v629
          %v646 = vpack.c.bf16 %v442, %v441
          %v647 = vpack.c.bf16 %v444, %v443
          %v648 = vpack.c.bf16 %v446, %v445
          %v649 = vpack.c.bf16 %v448, %v447
          %650 = vst [vmem:[#allocation3] sm:$0xff] %v646
          %651 = vst [vmem:[#allocation3 + $0x8] sm:$0xff] %v647
          %652 = vst [vmem:[#allocation3 + $0x10] sm:$0xff] %v648
          %653 = vst [vmem:[#allocation3 + $0x18] sm:$0xff] %v649
        $region56: #{tpu_custom_call.1} parent=39 // pred_fallthru
          _
        %s654 = smul.u32 %s26, 32
        %s655 = scalar_lea.vmem [#allocation5], %s654
        %v656 = vld [vmem:[%s655] sm:$0xff]
        %v657 = vld [vmem:[%s655 + $0x8] sm:$0xff]
        %v658 = vld [vmem:[%s655 + $0x10] sm:$0xff]
        %v659 = vld [vmem:[%s655 + $0x18] sm:$0xff]
        %s660 = scalar_lea.vmem [#allocation6], %s654
        %v661 = vld [vmem:[%s660] sm:$0xff]
        %v662 = vld [vmem:[%s660 + $0x8] sm:$0xff]
        %v663 = vld [vmem:[%s660 + $0x10] sm:$0xff]
        %v664 = vld [vmem:[%s660 + $0x18] sm:$0xff]
        %v665 = vld [vmem:[#allocation4] sm:$0x1]
        %667 = vset.pattern.permute.xlu0 0
        %668 = vperm.xlu0 %667, %v656
        %v669 = vpop.permute.xlu0 %668
        %672 = vset.pattern.permute.xlu0 0
        %673 = vperm.xlu0 %672, %v657
        %v674 = vpop.permute.xlu0 %673
        %677 = vset.pattern.permute.xlu0 0
        %678 = vperm.xlu0 %677, %v658
        %v679 = vpop.permute.xlu0 %678
        %682 = vset.pattern.permute.xlu0 0
        %683 = vperm.xlu0 %682, %v659
        %v684 = vpop.permute.xlu0 %683
        %v687 = vlaneseq
        %v688 = vshrl.u32 %v687, 7
        %v689 = vsub.s32 0, %v688
        %v690 = vrot.slane %v665, %v689
        %v692 = vadd.f32 %v669, %v690
        %v693 = vadd.f32 %v674, %v690
        %v694 = vadd.f32 %v679, %v690
        %v695 = vadd.f32 %v684, %v690
        %vm696 = vcmp.gt.f32.partialorder %v692, 0.0
        %vm697 = vcmp.gt.f32.partialorder %v693, 0.0
        %vm698 = vcmp.gt.f32.partialorder %v694, 0.0
        %vm699 = vcmp.gt.f32.partialorder %v695, 0.0
        %v700 = vmul.f32 %v692, 0.2
        %v701 = vmul.f32 %v693, 0.2
        %v702 = vmul.f32 %v694, 0.2
        %v703 = vmul.f32 %v695, 0.2
        %v704 = vsel %vm696, %v692, %v700
        %v705 = vsel %vm697, %v693, %v701
        %v706 = vsel %vm698, %v694, %v702
        %v707 = vsel %vm699, %v695, %v703
        %709 = vset.pattern.permute.xlu0 0
        %710 = vperm.xlu0 %709, %v661
        %v711 = vpop.permute.xlu0 %710
        %714 = vset.pattern.permute.xlu0 0
        %715 = vperm.xlu0 %714, %v662
        %v716 = vpop.permute.xlu0 %715
        %719 = vset.pattern.permute.xlu0 0
        %720 = vperm.xlu0 %719, %v663
        %v721 = vpop.permute.xlu0 %720
        %724 = vset.pattern.permute.xlu0 0
        %725 = vperm.xlu0 %724, %v664
        %v726 = vpop.permute.xlu0 %725
        %v728 = vsub.f32 %v704, %v711
        %v729 = vsub.f32 %v705, %v716
        %v730 = vsub.f32 %v706, %v721
        %v731 = vsub.f32 %v707, %v726
        %v732 = vmul.f32 %v728, 1.442695
        %v733 = vpow.pop %v732
        %v734 = vmul.f32 %v729, 1.442695
        %v735 = vpow.pop %v734
        %v736 = vmul.f32 %v730, 1.442695
        %v737 = vpow.pop %v736
        %v738 = vmul.f32 %v731, 1.442695
        %v739 = vpow.pop %v738
        %v740 = vld [vmem:[%s243] sm:$0xff]
        %v741 = vunpack.c.0.s8 %v740
        %v742 = vunpack.c.1.s8 %v740
        %v743 = vunpack.c.2.s8 %v740
        %v744 = vunpack.c.3.s8 %v740
        %v745 = vcvt.s32.f32 %v741
        %v746 = vcvt.s32.f32 %v742
        %v747 = vcvt.s32.f32 %v743
        %v748 = vcvt.s32.f32 %v744
        %v749 = vmul.f32 %v733, %v745
        %v750 = vmul.f32 %v735, %v746
        %v751 = vmul.f32 %v737, %v747
        %v752 = vmul.f32 %v739, %v748
        %v753 = vpack.c.bf16 %v750, %v749
        %v754 = vpack.c.bf16 %v752, %v751
        %v755 = vld [vmem:[#allocation3] sm:$0xff]
        %v756 = vld [vmem:[#allocation3 + $0x8] sm:$0xff]
        %v757 = vld [vmem:[#allocation3 + $0x10] sm:$0xff]
        %v758 = vld [vmem:[#allocation3 + $0x18] sm:$0xff]
        %vm759 = vcmask 523264
        %v761 = vsel %vm759, %v753, 0
        %v764 = vsel %vm759, %v754, 0
        %766 = vmatprep.subr.bf16.mxu0 0
        %767 = vmatpush1.bf16.msra.mxu0 %v755
        %768 = vmatprep.subr.bf16.mxu0 0
        %769 = vmatpush1.bf16.msra.mxu0 %v756
        %770 = vmatprep.subr.bf16.mxu0 0
        %771 = vmatpush1.bf16.msra.mxu0 %v757
        %772 = vmatprep.subr.bf16.mxu0 0
        %773 = vmatpush1.bf16.msra.mxu0 %v758
        %774 = vmatprep.subr.bf16.mxu0 0
        %775 = vmatpush1.bf16.msra.mxu0 0
        %776 = vmatprep.subr.bf16.mxu0 0
        %777 = vmatpush1.bf16.msra.mxu0 0
        %778 = vmatprep.subr.bf16.mxu0 0
        %779 = vmatpush1.bf16.msra.mxu0 0
        %780 = vmatprep.subr.bf16.mxu0 0
        %781 = vmatpush1.bf16.msra.mxu0 0
        %782 = vmatprep.subr.bf16.mxu0 0
        %783 = vmatpush1.bf16.msra.mxu0 0
        %784 = vmatprep.subr.bf16.mxu0 0
        %785 = vmatpush1.bf16.msra.mxu0 0
        %786 = vmatprep.subr.bf16.mxu0 0
        %787 = vmatpush1.bf16.msra.mxu0 0
        %788 = vmatprep.subr.bf16.mxu0 0
        %789 = vmatpush1.bf16.msra.mxu0 0
        %790 = vmatprep.subr.bf16.mxu0 0
        %791 = vmatpush1.bf16.msra.mxu0 0
        %792 = vmatprep.subr.bf16.mxu0 0
        %793 = vmatpush1.bf16.msra.mxu0 0
        %794 = vmatprep.subr.bf16.mxu0 0
        %795 = vmatpush1.bf16.msra.mxu0 0
        %796 = vmatprep.subr.bf16.mxu0 0
        %797 = vmatpush1.bf16.msra.mxu0 0
        %798 = vmatprep.mubr.bf16.mxu0 0
        %799 = vmatmul.mubr.bf16.gmra.mrb[0].mxu0 %v761
        %v800 = vpop.f32.mrb[0].mxu0
        %v801 = vadd.f32 0.0, %v800
        %v802 = vpop.f32.mrb[0].mxu0
        %v803 = vpop.f32.mrb[0].mxu0
        %v804 = vadd.f32 0.0, %v803
        %v805 = vpop.f32.mrb[0].mxu0
        %806 = vmatprep.mubr.bf16.mxu0 0
        %807 = vmatmul.mubr.bf16.gmra.mrb[0].mxu0 %v764
        %v808 = vpop.f32.mrb[0].mxu0
        %v809 = vadd.f32 0.0, %v808
        %v810 = vpop.f32.mrb[0].mxu0
        %v811 = vpop.f32.mrb[0].mxu0
        %v812 = vadd.f32 0.0, %v811
        %v813 = vpop.f32.mrb[0].mxu0
        %814 = vdwg.mxu0
        %v815 = vmax.f32 %v801, 1e-30
        %v816 = vmax.f32 %v804, 1e-30
        %v817 = vmax.f32 %v809, 1e-30
        %v818 = vmax.f32 %v812, 1e-30
        %v819 = vrcp.pop %v815
        %v820 = vrcp.pop %v816
        %v821 = vrcp.pop %v817
        %v822 = vrcp.pop %v818
        %824 = vset.pattern.permute.xlu0 125
        %825 = vperm.xlu0 %824, %v819
        %v826 = vpop.permute.xlu0 %825
        %829 = vset.pattern.permute.xlu0 125
        %830 = vperm.xlu0 %829, %v820
        %v831 = vpop.permute.xlu0 %830
        %834 = vset.pattern.permute.xlu0 125
        %835 = vperm.xlu0 %834, %v821
        %v836 = vpop.permute.xlu0 %835
        %839 = vset.pattern.permute.xlu0 125
        %840 = vperm.xlu0 %839, %v822
        %v841 = vpop.permute.xlu0 %840
        %v843 = vmul.f32 %v801, %v826
        %v844 = vmul.f32 %v804, %v831
        %v845 = vmul.f32 %v809, %v836
        %v846 = vmul.f32 %v812, %v841
        %s847 = scalar_lea.vmem %s4, %s25
        %v848 = vld [vmem:[%s847] sm:$0x1]
        %v850 = vlaneseq
        %v851 = vshrl.u32 %v850, 7
        %v852 = vsub.s32 0, %v851
        %v853 = vrot.slane %v848, %v852
        %v855 = vadd.f32 %v843, %v853
        %v856 = vadd.f32 %v844, %v853
        %v857 = vadd.f32 %v845, %v853
        %v858 = vadd.f32 %v846, %v853
        %p859 = scmp.lt.s32.totalorder %s25, 2
        %s860 = scalar_select %p859, 1, 0
        %s861 = scvt.s32.f32 %s860
        %v862 = vmin.f32 %v855, 0.0
        %v863 = vmin.f32 %v856, 0.0
        %v864 = vmin.f32 %v857, 0.0
        %v865 = vmin.f32 %v858, 0.0
        %v866 = vstv %s861
        %v867 = vmul.f32 %v866, %v862
        %v868 = vmul.f32 %v866, %v863
        %v869 = vmul.f32 %v866, %v864
        %v870 = vmul.f32 %v866, %v865
        %v871 = vsub.f32 %v855, %v867
        %v872 = vsub.f32 %v856, %v868
        %v873 = vsub.f32 %v857, %v869
        %v874 = vsub.f32 %v858, %v870
        %s875 = scalar_lea.vmem [#allocation2], %s654
        %876 = vst [vmem:[%s875] sm:$0xff] %v871
        %877 = vst [vmem:[%s875 + $0x8] sm:$0xff] %v872
        %878 = vst [vmem:[%s875 + $0x10] sm:$0xff] %v873
        %879 = vst [vmem:[%s875 + $0x18] sm:$0xff] %v874
        %p880 = scmp.eq.s32.totalorder %s25, 2
        %p881 = scmp.eq.s32.totalorder %s26, 1
        %p882 = pnand %p880, %p881
        %p883 = pneg %p882
        // Predicated region
        $region61: #{tpu_custom_call.1} parent=39 // pred_check
          _
        $region62: #{tpu_custom_call.1} parent=39 // pred_check_branch
          %885 = sbr.rel (%p882) target = $region64
        $region63: #{tpu_custom_call.1} parent=39 // pred_region
          %v886 = vld [vmem:[%s2] sm:$0x1]
          %v887 = vld [vmem:[#allocation2] sm:$0xff]
          %v888 = vld [vmem:[#allocation2 + $0x8] sm:$0xff]
          %v889 = vld [vmem:[#allocation2 + $0x10] sm:$0xff]
          %v890 = vld [vmem:[#allocation2 + $0x18] sm:$0xff]
          %v891 = vld [vmem:[#allocation2 + $0x20] sm:$0xff]
          %v892 = vld [vmem:[#allocation2 + $0x28] sm:$0xff]
          %v893 = vld [vmem:[#allocation2 + $0x30] sm:$0xff]
          %v894 = vld [vmem:[#allocation2 + $0x38] sm:$0xff]
          %v895 = vpack.c.bf16 %v888, %v887
          %v896 = vpack.c.bf16 %v890, %v889
          %v897 = vpack.c.bf16 %v892, %v891
          %v898 = vpack.c.bf16 %v894, %v893
          %v900 = vsel %vm759, %v886, 0
          %902 = vmatprep.subr.bf16.mxu0 0
          %903 = vmatpush1.bf16.msra.mxu0 %v895
          %904 = vmatprep.subr.bf16.mxu0 0
          %905 = vmatpush1.bf16.msra.mxu0 %v896
          %906 = vmatprep.subr.bf16.mxu0 0
          %907 = vmatpush1.bf16.msra.mxu0 %v897
          %908 = vmatprep.subr.bf16.mxu0 0
          %909 = vmatpush1.bf16.msra.mxu0 %v898
          %910 = vmatprep.subr.bf16.mxu0 0
          %911 = vmatpush1.bf16.msra.mxu0 0
          %912 = vmatprep.subr.bf16.mxu0 0
          %913 = vmatpush1.bf16.msra.mxu0 0
          %914 = vmatprep.subr.bf16.mxu0 0
          %915 = vmatpush1.bf16.msra.mxu0 0
          %916 = vmatprep.subr.bf16.mxu0 0
          %917 = vmatpush1.bf16.msra.mxu0 0
          %918 = vmatprep.subr.bf16.mxu0 0
          %919 = vmatpush1.bf16.msra.mxu0 0
          %920 = vmatprep.subr.bf16.mxu0 0
          %921 = vmatpush1.bf16.msra.mxu0 0
          %922 = vmatprep.subr.bf16.mxu0 0
          %923 = vmatpush1.bf16.msra.mxu0 0
          %924 = vmatprep.subr.bf16.mxu0 0
          %925 = vmatpush1.bf16.msra.mxu0 0
          %926 = vmatprep.subr.bf16.mxu0 0
          %927 = vmatpush1.bf16.msra.mxu0 0
          %928 = vmatprep.subr.bf16.mxu0 0
          %929 = vmatpush1.bf16.msra.mxu0 0
          %930 = vmatprep.subr.bf16.mxu0 0
          %931 = vmatpush1.bf16.msra.mxu0 0
          %932 = vmatprep.subr.bf16.mxu0 0
          %933 = vmatpush1.bf16.msra.mxu0 0
          %934 = vmatprep.mubr.bf16.mxu0 0
          %935 = vmatmul.mubr.bf16.gmra.mrb[0].mxu0 %v900
          %v936 = vpop.f32.mrb[0].mxu0
          %v937 = vadd.f32 0.0, %v936
          %v938 = vpop.f32.mrb[0].mxu0
          %v939 = vpop.f32.mrb[0].mxu0
          %v940 = vpop.f32.mrb[0].mxu0
          %941 = vdwg.mxu0
          %v942 = vlaneseq
          %v943 = vand.u32 %v942, 127
          %vm944 = vcmp.lt.s32.totalorder %v943, 32
          %v945 = vsel %vm944, %v937, 0.0
          %v946 = vmul.f32 %v945, %v945
          %vm947 = vcmask 1041408
          %v948 = vsel %vm947, %v946, 0.0
          %949 = vadd.xlane.f32.xlu0 %v948
          %v950 = vpop.xlane.xlu0 %949
          %v951 = vrsqrt.pop %v950
          %v952 = vmul.f32 %v950, %v951
          %vm953 = vcmp.eq.f32.partialorder %v950, inf
          %v954 = vsel %vm953, %v950, %v952
          %vm955 = vcmp.eq.f32.partialorder %v950, 0.0
          %v956 = vand.u32 %v950, 2147483648
          %v957 = vsel %vm955, %v956, %v954
          %v958 = vmax.f32 %v957, 1e-12
          %v959 = vrcp.pop %v958
          %v960 = vmul.f32 %v945, %v959
          %961 = vst [vmem:[#allocation13] sm:$0x3] %v960
        $region64: #{tpu_custom_call.1} parent=39 // pred_fallthru
          _
        // Predicated region
        $region65: #{tpu_custom_call.1} parent=39 // pred_check
          %p962 = pneg %p156
        $region66: #{tpu_custom_call.1} parent=39 // pred_check_branch
          %964 = sbr.rel (%p962) target = $region68
        $region67: #{tpu_custom_call.1} parent=39 // pred_region
          %s966 = ssub.s32 32, 32
          %967 = vsyncadd [#allocation9], %s966
          %s969 = sshll.u32 [#allocation13], 4
          %s970 = int_to_ptr.vmem [resolvable:$true] %s969
          %972 = dma.vmem_to_hbm [thread:$0]  %s970, 32, %s5, [#allocation9]
        $region68: #{tpu_custom_call.1} parent=39 // pred_fallthru
          _
        // Predicated region
        $region69: #{tpu_custom_call.1} parent=39 // pred_check
          %p973 = pneg %p156
        $region70: #{tpu_custom_call.1} parent=39 // pred_check_branch
          %975 = sbr.rel (%p973) target = $region72
        $region71: #{tpu_custom_call.1} parent=39 // pred_region
          %976 = dma.done [#allocation9], 32
        $region72: #{tpu_custom_call.1} parent=39 // pred_fallthru
          _
      $region40: #{tpu_custom_call.1} parent=5 // pred_fallthru
        _
      %p977 = scmp.le.s32.totalorder 2, %s16
      // Predicated region
      $region73: #{tpu_custom_call.1} parent=5 // pred_check
        %p978 = pneg %p977
      $region74: #{tpu_custom_call.1} parent=5 // pred_check_branch
        %980 = sbr.rel (%p978) target = $region76
      $region75: #{tpu_custom_call.1} parent=5 // pred_region
        %s981 = ssub.s32 %s16, 2
      $region76: #{tpu_custom_call.1} parent=5 // pred_fallthru
        _
    $region6: #{tpu_custom_call.1} parent=1 // loop_footer
      %s20 = sadd.s32 1, %s16
    $region7: #{tpu_custom_call.1} parent=1 // loop_footer_branch
      %15 = sbr.rel target = $region3
    $region8: #{tpu_custom_call.1} parent=1 // loop_exit
      _
    %982 = vsyncpa [#allocation8], 1
    %s983 = scalar_lea.sflag [#allocation8], 1
    %984 = vsyncpa %s983, 1
    %985 = vsyncpa [#allocation11], 1
    %s986 = scalar_lea.sflag [#allocation11], 1
    %987 = vsyncpa %s986, 1
    %988 = vsyncpa [#allocation9], 1
    %s989 = scalar_lea.sflag [#allocation9], 1
    %990 = vsyncpa %s989, 1

</llo_original>
